<compile_context>
chip_gen: v5e
topology: v5e:2x2
jax: 0.10.0
libtpu: 0.0.40
codegen_flags: <defaults>
</compile_context>

<pallas_src>
import functools

import jax
import jax.numpy as jnp
from jax.experimental import pallas as pl
from jax.experimental.pallas import tpu as pltpu

_LANES = 128            # TPU vreg lane width
_MAX_BLOCK_M = 1024     # packed-row tile cap (tile = 1024*128*4B = 512 KiB f32)


def _cdiv(a, b):
    return -(-a // b)


def _round_up(x, m):
    return _cdiv(x, m) * m


def _mixer_gater_kernel(h_ref, e_ref, wh_ref, we_ref, b_ref, o_ref):
    # h_ref, e_ref, o_ref: (block_m, K)   wh_ref, we_ref: (K, K)   b_ref: (1, K)
    acc = jnp.dot(h_ref[...], wh_ref[...], preferred_element_type=jnp.float32)
    acc = acc + jnp.dot(e_ref[...], we_ref[...], preferred_element_type=jnp.float32)
    acc = acc + b_ref[...].astype(jnp.float32)          # broadcast (1, K) over rows
    # f32 epilogue (EUP sigmoid + VPU mul); cast to output dtype only at the store.
    o_ref[...] = (jax.nn.sigmoid(acc) * 2.0).astype(o_ref.dtype)


@functools.partial(jax.jit, static_argnames=("block_m",))
def mixer_gater(hidden, embed, weight, bias, *, block_m=None):
    """hidden, embed: (..., E);  weight: (E, 2E) (PyTorch Linear layout);
    bias: (E,).  Returns sigmoid(cat([hidden, embed], -1) @ weight.T + bias) * 2."""
    assert hidden.shape == embed.shape
    *lead, E = hidden.shape
    M = 1
    for d in lead:
        M *= d

    # ---- lane packing factor ------------------------------------------------
    pack = _LANES // E if (E < _LANES and _LANES % E == 0) else 1
    K = pack * E                                  # packed lane width (128 when packed)

    h2 = hidden.reshape(M, E)
    e2 = embed.reshape(M, E)

    # ---- weight prep (tiny; hoist/precompute outside the call for large E) ---
    # Keep weights in their native dtype (bf16 stays bf16 -> native MXU path);
    # f32 accumulation comes from preferred_element_type in the kernel.
    wh_t = weight[:, :E].T                        # (E, E): y += h @ Wh^T
    we_t = weight[:, E:].T                        # (E, E): y += e @ We^T
    eye_p = jnp.eye(pack, dtype=weight.dtype)
    wh_p = jnp.kron(eye_p, wh_t)                  # (K, K) block-diagonal
    we_p = jnp.kron(eye_p, we_t)                  # (K, K) block-diagonal
    b_p = jnp.tile(bias, pack).reshape(1, K)

    # ---- row tiling (packed rows) -------------------------------------------
    Mp = _cdiv(M, pack)                           # packed row count before padding
    if block_m is None:
        if Mp <= 8:
            block_m = Mp                          # tiny input: one full tile
        else:
            # big tiles (mem-bound), but >= 2 grid steps so v7x's two
            # TensorCores both get work; sublane-aligned (multiple of 8).
            block_m = min(_MAX_BLOCK_M, _round_up(_cdiv(Mp, 2), 8))

    Mp_pad = _round_up(Mp, block_m)               # pad rows to a tile multiple
    M_pad = Mp_pad * pack
    if M_pad != M:
        h2 = jnp.pad(h2, ((0, M_pad - M), (0, 0)))
        e2 = jnp.pad(e2, ((0, M_pad - M), (0, 0)))
    hp = h2.reshape(Mp_pad, K)                    # contiguous reshape = lane packing
    ep = e2.reshape(Mp_pad, K)

    grid = (Mp_pad // block_m,)

    itemsize = hidden.dtype.itemsize
    cost = pl.CostEstimate(
        flops=4 * M * E * E,                      # two (M,E)x(E,E) matmuls
        transcendentals=M * E,                    # sigmoid
        bytes_accessed=3 * M * E * itemsize + (2 * E * E + E) * weight.dtype.itemsize,
    )

    out_p = pl.pallas_call(
        _mixer_gater_kernel,
        out_shape=jax.ShapeDtypeStruct((Mp_pad, K), hidden.dtype),
        grid_spec=pltpu.PrefetchScalarGridSpec(
            num_scalar_prefetch=0,
            grid=grid,
            in_specs=[
                pl.BlockSpec((block_m, K), lambda i: (i, 0)),   # hidden rows (packed)
                pl.BlockSpec((block_m, K), lambda i: (i, 0)),   # embed rows (packed)
                pl.BlockSpec((K, K), lambda i: (0, 0)),         # Wh^T block-diag (resident)
                pl.BlockSpec((K, K), lambda i: (0, 0)),         # We^T block-diag (resident)
                pl.BlockSpec((1, K), lambda i: (0, 0)),         # packed bias
            ],
            out_specs=pl.BlockSpec((block_m, K), lambda i: (i, 0)),
        ),
        compiler_params=pltpu.CompilerParams(
            dimension_semantics=("parallel",),     # megacore sharding on v7x
            vmem_limit_bytes=48 * 1024 * 1024,     # allow large tiles on v5e/v6e/v7x
        ),
        cost_estimate=cost,
    )(hp, ep, wh_p, we_p, b_p)

    out = out_p.reshape(M_pad, E)[:M]
    return out.reshape(*lead, E)


def _reference(hidden, embed, weight, bias):
    x = jnp.concatenate([hidden, embed], axis=-1)
    return jax.nn.sigmoid(x @ weight.T + bias) * 2.0


if __name__ == "__main__":
    B, S, E = 2, 8, 32  # small shapes: batch=2, seq=8, embed_dim=32
    key = jax.random.PRNGKey(0)
    k_h, k_e, k_w, k_b = jax.random.split(key, 4)

    hidden = jax.random.normal(k_h, (B, S, E), dtype=jnp.float32)
    embed = jax.random.normal(k_e, (B, S, E), dtype=jnp.float32)

    # Parameters exactly as the module's __init__: Linear(2E -> E), zero-init.
    weight_zero = jnp.zeros((E, 2 * E), dtype=jnp.float32)
    bias_zero = jnp.zeros((E,), dtype=jnp.float32)

    out = jax.block_until_ready(mixer_gater(hidden, embed, weight_zero, bias_zero))
    ref = _reference(hidden, embed, weight_zero, bias_zero)
    assert out.shape == (B, S, E)
    assert jnp.allclose(out, ref, atol=1e-5), "zero-weight check failed"
    # With zero weights/bias the gate is sigmoid(0)*2 == 1 everywhere.
    assert jnp.allclose(out, jnp.ones_like(out), atol=1e-6)

    # Non-trivial weights: validates the fused split-weight + lane-packed matmul.
    weight_rnd = 0.05 * jax.random.normal(k_w, (E, 2 * E), dtype=jnp.float32)
    bias_rnd = 0.05 * jax.random.normal(k_b, (E,), dtype=jnp.float32)
    out2 = jax.block_until_ready(mixer_gater(hidden, embed, weight_rnd, bias_rnd))
    ref2 = _reference(hidden, embed, weight_rnd, bias_rnd)
    assert jnp.allclose(out2, ref2, atol=1e-5), "random-weight check failed"

    # Ragged row count (batch*seq not a multiple of pack factor / tile):
    # exercises the zero-padding path (no divisibility assert anymore).
    h3 = jax.random.normal(k_h, (3, 5, E), dtype=jnp.float32)
    e3 = jax.random.normal(k_e, (3, 5, E), dtype=jnp.float32)
    out3 = jax.block_until_ready(mixer_gater(h3, e3, weight_rnd, bias_rnd))
    ref3 = _reference(h3, e3, weight_rnd, bias_rnd)
    assert out3.shape == (3, 5, E)
    assert jnp.allclose(out3, ref3, atol=1e-5), "padded-shape check failed"

    # bf16 activations + bf16 weights: native-dtype MXU path, f32 accumulation.
    hb, eb = hidden.astype(jnp.bfloat16), embed.astype(jnp.bfloat16)
    wb, bb = weight_rnd.astype(jnp.bfloat16), bias_rnd.astype(jnp.bfloat16)
    out4 = jax.block_until_ready(mixer_gater(hb, eb, wb, bb))
    ref4 = _reference(hb.astype(jnp.float32), eb.astype(jnp.float32),
                      wb.astype(jnp.float32), bb.astype(jnp.float32))
    assert jnp.allclose(out4.astype(jnp.float32), ref4, atol=5e-2), "bf16 check failed"

    print("KERNEL_OK")
</pallas_src>

<mosaic_0001>
module attributes {stable_mosaic.version = 11 : i64} {
  func.func @_mixer_gater_kernel(%arg0: i32, %arg1: memref<4x128xf32, #tpu.memory_space<vmem>>, %arg2: memref<4x128xf32, #tpu.memory_space<vmem>>, %arg3: memref<128x128xf32, #tpu.memory_space<vmem>>, %arg4: memref<128x128xf32, #tpu.memory_space<vmem>>, %arg5: memref<1x128xf32, #tpu.memory_space<vmem>>, %arg6: memref<4x128xf32, #tpu.memory_space<vmem>>) attributes {dimension_semantics = [#tpu.dimension_semantics<parallel>], iteration_bounds = array<i64: 1>, scalar_prefetch = 0 : i64, scratch_operands = 0 : i64, tpu.core_type = #tpu.core_type<tc>, window_params = [{transform_indices = @transform_0, window_bounds = array<i64: 4, 128>}, {transform_indices = @transform_1, window_bounds = array<i64: 4, 128>}, {pipeline_mode = #tpu.pipeline_mode<synchronous>, transform_indices = @transform_2, window_bounds = array<i64: 128, 128>}, {pipeline_mode = #tpu.pipeline_mode<synchronous>, transform_indices = @transform_3, window_bounds = array<i64: 128, 128>}, {pipeline_mode = #tpu.pipeline_mode<synchronous>, transform_indices = @transform_4, window_bounds = array<i64: 1, 128>}, {transform_indices = @transform_5, window_bounds = array<i64: 4, 128>}]} {
    %c0 = arith.constant 0 : index
    %c0_0 = arith.constant 0 : index
    %0 = vector.load %arg1[%c0, %c0_0] : memref<4x128xf32, #tpu.memory_space<vmem>>, vector<4x128xf32>
    %c0_1 = arith.constant 0 : index
    %c0_2 = arith.constant 0 : index
    %1 = vector.load %arg3[%c0_1, %c0_2] : memref<128x128xf32, #tpu.memory_space<vmem>>, vector<128x128xf32>
    %cst = arith.constant dense<0.000000e+00> : vector<4x128xf32>
    %2 = tpu.matmul %0, %1, %cst {dimension_numbers = #tpu.dot_dimension_numbers<[1], [0], [0], [1], [0, 0, 1, 1], [], []>} : vector<4x128xf32>, vector<128x128xf32>, vector<4x128xf32> -> vector<4x128xf32>
    %c0_3 = arith.constant 0 : index
    %c0_4 = arith.constant 0 : index
    %3 = vector.load %arg2[%c0_3, %c0_4] : memref<4x128xf32, #tpu.memory_space<vmem>>, vector<4x128xf32>
    %c0_5 = arith.constant 0 : index
    %c0_6 = arith.constant 0 : index
    %4 = vector.load %arg4[%c0_5, %c0_6] : memref<128x128xf32, #tpu.memory_space<vmem>>, vector<128x128xf32>
    %cst_7 = arith.constant dense<0.000000e+00> : vector<4x128xf32>
    %5 = tpu.matmul %3, %4, %cst_7 {dimension_numbers = #tpu.dot_dimension_numbers<[1], [0], [0], [1], [0, 0, 1, 1], [], []>} : vector<4x128xf32>, vector<128x128xf32>, vector<4x128xf32> -> vector<4x128xf32>
    %6 = arith.addf %2, %5 : vector<4x128xf32>
    %c0_8 = arith.constant 0 : index
    %c0_9 = arith.constant 0 : index
    %7 = vector.load %arg5[%c0_8, %c0_9] : memref<1x128xf32, #tpu.memory_space<vmem>>, vector<1x128xf32>
    %8 = vector.broadcast %7 : vector<1x128xf32> to vector<4x128xf32>
    %9 = arith.addf %6, %8 : vector<4x128xf32>
    %10 = arith.negf %9 : vector<4x128xf32>
    %11 = math.exp %10 : vector<4x128xf32>
    %cst_10 = arith.constant 1.000000e+00 : f32
    %12 = vector.broadcast %cst_10 : f32 to vector<4x128xf32>
    %13 = arith.addf %12, %11 : vector<4x128xf32>
    %14 = arith.divf %12, %13 : vector<4x128xf32>
    %cst_11 = arith.constant 2.000000e+00 : f32
    %15 = vector.broadcast %cst_11 : f32 to vector<4x128xf32>
    %16 = arith.mulf %14, %15 : vector<4x128xf32>
    %c0_12 = arith.constant 0 : index
    %c0_13 = arith.constant 0 : index
    %17 = vector.load %arg6[%c0_12, %c0_13] : memref<4x128xf32, #tpu.memory_space<vmem>>, vector<4x128xf32>
    tpu.vector_store %arg6[%c0_12, %c0_13], %16 {strides = array<i32>} : memref<4x128xf32, #tpu.memory_space<vmem>>, vector<4x128xf32>,
    return
  }
  func.func @transform_0(%arg0: i32) -> (i32, i32) {
    %c0_i32 = arith.constant 0 : i32
    %c0_i32_0 = arith.constant 0 : i32
    return %arg0, %c0_i32 : i32, i32
  }
  func.func @transform_1(%arg0: i32) -> (i32, i32) {
    %c0_i32 = arith.constant 0 : i32
    %c0_i32_0 = arith.constant 0 : i32
    return %arg0, %c0_i32 : i32, i32
  }
  func.func @transform_2(%arg0: i32) -> (i32, i32) {
    %c0_i32 = arith.constant 0 : i32
    %c0_i32_0 = arith.constant 0 : i32
    %c0_i32_1 = arith.constant 0 : i32
    return %c0_i32, %c0_i32_0 : i32, i32
  }
  func.func @transform_3(%arg0: i32) -> (i32, i32) {
    %c0_i32 = arith.constant 0 : i32
    %c0_i32_0 = arith.constant 0 : i32
    %c0_i32_1 = arith.constant 0 : i32
    return %c0_i32, %c0_i32_0 : i32, i32
  }
  func.func @transform_4(%arg0: i32) -> (i32, i32) {
    %c0_i32 = arith.constant 0 : i32
    %c0_i32_0 = arith.constant 0 : i32
    %c0_i32_1 = arith.constant 0 : i32
    return %c0_i32, %c0_i32_0 : i32, i32
  }
  func.func @transform_5(%arg0: i32) -> (i32, i32) {
    %c0_i32 = arith.constant 0 : i32
    %c0_i32_0 = arith.constant 0 : i32
    return %arg0, %c0_i32 : i32, i32
  }
}

</mosaic_0001>

<llo_original>
// kernel: tile.8
$region0: #{tile.8}
  #allocation0 [shape = 's32[1]{0}', space=sflag, size = 0x4, scoped, tag = 'scoped memory for tile.8']
  %s0 = inlined_call_operand.vmem [shape: f32[32], index: 0, kind: input, shape index: {}]
  %s1 = inlined_call_operand.vmem [shape: f32[4,32], index: 1, kind: output, shape index: {}]
  // Predicated region
  $region2: #{tile.8} parent=0 // pred_check
    _
  $region3: #{tile.8} parent=0 // pred_check_branch
    %3 = sbr.rel (0) target = $region5
  $region4: #{tile.8} parent=0 // pred_region
    _
  $region5: #{tile.8} parent=0 // pred_fallthru
    _
  %v4 = vld [vmem:[%s0] ss:$0 sm:$0xff]
  %5 = vst [vmem:[%s1] sm:$0xf] %v4

// kernel: tile.9
$region0: #{tile.9}
  %s0 = inlined_call_operand.vmem [shape: f32[4,32], index: 0, kind: input, shape index: {}]
  %s1 = inlined_call_operand.vmem [shape: f32[1,128], index: 1, kind: output, shape index: {}]
  $region1: #{tile.9} parent=0
    #allocation0 [shape = 'u8[4096]{0}', space=vmem, size = 0x1000, scoped, tag = 'scoped mem for output reshape']
    #allocation1 [shape = 'u8[4096]{0}', space=vmem, size = 0x1000, scoped, tag = 'scoped mem for input reshape']
    %s3 = ssub.s32 16, 1
    %v4 = vld [vmem:[%s0] sm:%s3]
    %5 = vst [vmem:[#allocation1] sm:%s3] %v4
    %v6 = vld [vmem:[#allocation1] sm:$0x1]
    %vm7 = vcmask 261120
    %8 = vst.msk [vmem:[#allocation0] sm:$0x1] %vm7, %v6
    %s9 = scalar_lea.vmem [#allocation1], 3
    %v10 = vld [vmem:[%s9] sm:$0x1]
    %11 = vrot.lane.b32.xlu0 %v10, 96
    %v12 = vpop.permute.xlu0 %11
    %vm13 = vcmask 1048320
    %14 = vst.msk [vmem:[#allocation0] sm:$0x1] %vm13, %v12
    %s15 = scalar_lea.vmem [#allocation1], 2
    %v16 = vld [vmem:[%s15] sm:$0x1]
    %17 = vrot.lane.b32.xlu0 %v16, 64
    %v18 = vpop.permute.xlu0 %17
    %vm19 = vcmask 785920
    %20 = vst.msk [vmem:[#allocation0] sm:$0x1] %vm19, %v18
    %s21 = scalar_lea.vmem [#allocation1], 1
    %v22 = vld [vmem:[%s21] sm:$0x1]
    %23 = vrot.lane.b32.xlu0 %v22, 32
    %v24 = vpop.permute.xlu0 %23
    %vm25 = vcmask 523520
    %26 = vst.msk [vmem:[#allocation0] sm:$0x1] %vm25, %v24
    %s28 = ssub.s32 2, 1
    %v29 = vld [vmem:[#allocation0] sm:%s28]
    %s31 = ssub.s32 2, 1
    %32 = vst [vmem:[%s1] sm:%s31] %v29

// kernel: mixer_gater.1
$region0: #{mixer_gater.1}
  #allocation0 [shape = 'u32[]', space=smem, size = 0x4, offset = 0x4, fixed_abs, tag = 'smem constant byte address 0x4 - core index']
  #allocation1 [shape = 'u32[72,128]{1,0:T(1,128)}', space=vmem, size = 0x9000, scoped, tag = 'internal scratch']
  %s0 = inlined_call_operand.vmem [shape: f32[4,128], index: 0, kind: input, shape index: {}]
  %s1 = inlined_call_operand.vmem [shape: f32[4,128], index: 1, kind: input, shape index: {}]
  %s2 = inlined_call_operand.vmem [shape: f32[128,128], index: 2, kind: input, shape index: {}]
  %s3 = inlined_call_operand.vmem [shape: f32[128,128], index: 3, kind: input, shape index: {}]
  %s4 = inlined_call_operand.vmem [shape: f32[1,128], index: 4, kind: input, shape index: {}]
  %s5 = inlined_call_operand.vmem [shape: f32[4,128], index: 5, kind: output, shape index: {}]
  %s6 = sld [smem:[#allocation0]]
  $region30: #{mixer_gater.1} parent=0
    _
  %s8 = ssub.s32 1, %s6
  %s9 = scalar_select 0, %s8, %s6
  // Predicated region
  $region2: #{mixer_gater.1} parent=0 // pred_check
    _
  $region3: #{mixer_gater.1} parent=0 // pred_check_branch
    %11 = sbr.rel (0) target = $region5
  $region4: #{mixer_gater.1} parent=0 // pred_region
    _
  $region5: #{mixer_gater.1} parent=0 // pred_fallthru
    _
  // Predicated region
  $region6: #{mixer_gater.1} parent=0 // pred_check
    _
  $region7: #{mixer_gater.1} parent=0 // pred_check_branch
    %13 = sbr.rel (0) target = $region9
  $region8: #{mixer_gater.1} parent=0 // pred_region
    _
  $region9: #{mixer_gater.1} parent=0 // pred_fallthru
    _
  // Predicated region
  $region10: #{mixer_gater.1} parent=0 // pred_check
    _
  $region11: #{mixer_gater.1} parent=0 // pred_check_branch
    %15 = sbr.rel (0) target = $region13
  $region12: #{mixer_gater.1} parent=0 // pred_region
    _
  $region13: #{mixer_gater.1} parent=0 // pred_fallthru
    _
  // Predicated region
  $region14: #{mixer_gater.1} parent=0 // pred_check
    _
  $region15: #{mixer_gater.1} parent=0 // pred_check_branch
    %17 = sbr.rel (0) target = $region17
  $region16: #{mixer_gater.1} parent=0 // pred_region
    _
  $region17: #{mixer_gater.1} parent=0 // pred_fallthru
    _
  // Predicated region
  $region18: #{mixer_gater.1} parent=0 // pred_check
    _
  $region19: #{mixer_gater.1} parent=0 // pred_check_branch
    %19 = sbr.rel (0) target = $region21
  $region20: #{mixer_gater.1} parent=0 // pred_region
    _
  $region21: #{mixer_gater.1} parent=0 // pred_fallthru
    _
  %v20 = vld [vmem:[%s0] sm:$0xf]
  %v21 = vld [vmem:[%s2] sm:$0xff]
  %v22 = vld [vmem:[%s2 + $0x8] sm:$0xff]
  %v23 = vld [vmem:[%s2 + $0x10] sm:$0xff]
  %v24 = vld [vmem:[%s2 + $0x18] sm:$0xff]
  %v25 = vld [vmem:[%s2 + $0x20] sm:$0xff]
  %v26 = vld [vmem:[%s2 + $0x28] sm:$0xff]
  %v27 = vld [vmem:[%s2 + $0x30] sm:$0xff]
  %v28 = vld [vmem:[%s2 + $0x38] sm:$0xff]
  %v29 = vld [vmem:[%s2 + $0x40] sm:$0xff]
  %v30 = vld [vmem:[%s2 + $0x48] sm:$0xff]
  %v31 = vld [vmem:[%s2 + $0x50] sm:$0xff]
  %v32 = vld [vmem:[%s2 + $0x58] sm:$0xff]
  %v33 = vld [vmem:[%s2 + $0x60] sm:$0xff]
  %v34 = vld [vmem:[%s2 + $0x68] sm:$0xff]
  %v35 = vld [vmem:[%s2 + $0x70] sm:$0xff]
  %v36 = vld [vmem:[%s2 + $0x78] sm:$0xff]
  %v37 = vld [vmem:[%s1] sm:$0xf]
  %v38 = vld [vmem:[%s3] sm:$0xff]
  %v39 = vld [vmem:[%s3 + $0x8] sm:$0xff]
  %v40 = vld [vmem:[%s3 + $0x10] sm:$0xff]
  %v41 = vld [vmem:[%s3 + $0x18] sm:$0xff]
  %v42 = vld [vmem:[%s3 + $0x20] sm:$0xff]
  %v43 = vld [vmem:[%s3 + $0x28] sm:$0xff]
  %v44 = vld [vmem:[%s3 + $0x30] sm:$0xff]
  %v45 = vld [vmem:[%s3 + $0x38] sm:$0xff]
  %v46 = vld [vmem:[%s3 + $0x40] sm:$0xff]
  %v47 = vld [vmem:[%s3 + $0x48] sm:$0xff]
  %v48 = vld [vmem:[%s3 + $0x50] sm:$0xff]
  %v49 = vld [vmem:[%s3 + $0x58] sm:$0xff]
  %v50 = vld [vmem:[%s3 + $0x60] sm:$0xff]
  %v51 = vld [vmem:[%s3 + $0x68] sm:$0xff]
  %v52 = vld [vmem:[%s3 + $0x70] sm:$0xff]
  %v53 = vld [vmem:[%s3 + $0x78] sm:$0xff]
  %54 = vmatpush.msra.mxu0 %v53
  %55 = vmatpush.msra.mxu0 %v52
  %56 = vmatpush.msra.mxu0 %v51
  %57 = vmatpush.msra.mxu0 %v50
  %58 = vmatpush.msra.mxu0 %v49
  %59 = vmatpush.msra.mxu0 %v48
  %60 = vmatpush.msra.mxu0 %v47
  %61 = vmatpush.msra.mxu0 %v46
  %62 = vmatpush.msra.mxu0 %v45
  %63 = vmatpush.msra.mxu0 %v44
  %64 = vmatpush.msra.mxu0 %v43
  %65 = vmatpush.msra.mxu0 %v42
  %66 = vmatpush.msra.mxu0 %v41
  %67 = vmatpush.msra.mxu0 %v40
  %68 = vmatpush.msra.mxu0 %v39
  %69 = vmatpush.msra.mxu0 %v38
  %70 = vmatmul.f32.gmra.mxu0 %v37
  %v71 = vpop.f32.mrf.mxu0
  %v72 = vadd.f32 0.0, %v71
  %73 = vdwg.mxu0
  %74 = vmatpush.msra.mxu0 %v36
  %75 = vmatpush.msra.mxu0 %v35
  %76 = vmatpush.msra.mxu0 %v34
  %77 = vmatpush.msra.mxu0 %v33
  %78 = vmatpush.msra.mxu0 %v32
  %79 = vmatpush.msra.mxu0 %v31
  %80 = vmatpush.msra.mxu0 %v30
  %81 = vmatpush.msra.mxu0 %v29
  %82 = vmatpush.msra.mxu0 %v28
  %83 = vmatpush.msra.mxu0 %v27
  %84 = vmatpush.msra.mxu0 %v26
  %85 = vmatpush.msra.mxu0 %v25
  %86 = vmatpush.msra.mxu0 %v24
  %87 = vmatpush.msra.mxu0 %v23
  %88 = vmatpush.msra.mxu0 %v22
  %89 = vmatpush.msra.mxu0 %v21
  %90 = vmatmul.f32.gmra.mxu0 %v20
  %v91 = vpop.f32.mrf.mxu0
  %v92 = vadd.f32 %v72, %v91
  %93 = vdwg.mxu0
  %v94 = vld [vmem:[%s4] sm:$0x1]
  %v96 = vperm.slane %v94, 0
  %v98 = vadd.f32 %v92, %v96
  %v99 = vxor.u32 %v98, 2147483648
  %v100 = vmul.f32 %v99, 1.442695
  %v101 = vpow.pop %v100
  %v102 = vadd.f32 %v101, 1.0
  %v103 = vrcp.pop %v102
  %v104 = vmul.f32 %v102, %v103
  %v105 = vsub.f32 1.0, %v104
  %v106 = vmul.f32 %v103, %v105
  %v107 = vadd.f32 %v103, %v106
  %vm108 = vweird.f32 %v102
  %vm109 = vweird.f32 %v103
  %vm110 = vmor %vm108, %vm109
  %v111 = vsel %vm110, %v103, %v107
  %v112 = vand.u32 2147483647, %v102
  %vm113 = vcmp.eq.f32.partialorder %v112, 8.507059e+37
  %v114 = vand.u32 %v102, 2147483648
  %v115 = vor.u32 1.1754944e-38, %v114
  %v116 = vsel %vm113, %v115, %v111
  %v117 = vmul.f32 1.0, %v116
  %v118 = vmul.f32 %v117, 2.0
  %119 = vst [vmem:[%s5] sm:$0xf] %v118
  // Predicated region
  $region22: #{mixer_gater.1} parent=0 // pred_check
    _
  $region23: #{mixer_gater.1} parent=0 // pred_check_branch
    %121 = sbr.rel (0) target = $region25
  $region24: #{mixer_gater.1} parent=0 // pred_region
    _
  $region25: #{mixer_gater.1} parent=0 // pred_fallthru
    _
  // Predicated region
  $region26: #{mixer_gater.1} parent=0 // pred_check
    _
  $region27: #{mixer_gater.1} parent=0 // pred_check_branch
    %123 = sbr.rel (0) target = $region29
  $region28: #{mixer_gater.1} parent=0 // pred_region
    _
  $region29: #{mixer_gater.1} parent=0 // pred_fallthru
    _

</llo_original>
